<compile_context>
chip_gen: v5e
topology: v5e:2x2
jax: 0.10.0
libtpu: 0.0.40
codegen_flags: <defaults>
</compile_context>

<pallas_src>
import functools

import jax
import jax.numpy as jnp
from jax.experimental import pallas as pl
from jax.experimental.pallas import tpu as pltpu

_LANE = 128
_MAX_TILE_M = 2048


def _round_up(x, m):
    return ((x + m - 1) // m) * m


def _cdiv(a, b):
    return -(-a // b)


def _vmem_capacity_bytes():
    """Per-TensorCore VMEM capacity (v5e/v6e: 128 MiB, v7x: 64 MiB)."""
    try:
        info = pltpu.get_tpu_info()
        cap = int(getattr(info, "vmem_capacity_bytes", 0))
        if cap > 0:
            return cap
    except Exception:
        pass
    return 64 << 20  # conservative default: v7x per-TC budget


# --------------------------- fused whole-MLP kernel ---------------------------

def _mlp_kernel(num_hidden_layers, x_ref, *refs):
    # refs = (w_in, b_in, [w_h0, b_h0, ...], w_out, b_out, o)
    w_in_ref, b_in_ref = refs[0], refs[1]
    hidden_refs = refs[2:2 + 2 * num_hidden_layers]
    w_out_ref = refs[2 + 2 * num_hidden_layers]
    b_out_ref = refs[3 + 2 * num_hidden_layers]
    o_ref = refs[4 + 2 * num_hidden_layers]

    # input layer + ReLU (MXU matmul, f32 accumulate; bias-add/ReLU in f32)
    h = jnp.dot(x_ref[...], w_in_ref[...], preferred_element_type=jnp.float32)
    h = jnp.maximum(h + b_in_ref[...], 0.0)

    # hidden layers + ReLU (statically unrolled; intermediates stay in vregs/VMEM)
    for l in range(num_hidden_layers):
        w_ref = hidden_refs[2 * l]
        b_ref = hidden_refs[2 * l + 1]
        h = jnp.dot(h.astype(w_ref.dtype), w_ref[...],
                    preferred_element_type=jnp.float32)
        h = jnp.maximum(h + b_ref[...], 0.0)

    # output layer + ReLU
    out = jnp.dot(h.astype(w_out_ref.dtype), w_out_ref[...],
                  preferred_element_type=jnp.float32)
    o_ref[...] = jnp.maximum(out + b_out_ref[...], 0.0).astype(o_ref.dtype)


# ----------------- tiled-weights fallback (per-layer matmul) -----------------

def _linear_relu_kernel(x_ref, w_ref, b_ref, o_ref, acc_ref):
    @pl.when(pl.program_id(2) == 0)
    def _():
        acc_ref[...] = jnp.zeros_like(acc_ref)

    acc_ref[...] += jnp.dot(x_ref[...], w_ref[...],
                            preferred_element_type=jnp.float32)

    @pl.when(pl.program_id(2) == pl.num_programs(2) - 1)
    def _():
        o_ref[...] = jnp.maximum(acc_ref[...] + b_ref[...], 0.0).astype(o_ref.dtype)


def _linear_relu_tiled(x, w, b, out_dtype, *, tm=256, tn=256, tk=512):
    M, K = x.shape
    N = w.shape[1]
    tm = M if M <= tm else tm          # block == full dim is always legal
    tn = N if N <= tn else tn
    # K tiles must divide exactly (ragged K blocks would accumulate padding garbage).
    # TODO(synk): mask ragged K tiles to allow tk < K when K % tk != 0.
    tk = tk if (K > tk and K % tk == 0) else K
    grid = (_cdiv(M, tm), _cdiv(N, tn), _cdiv(K, tk))
    return pl.pallas_call(
        _linear_relu_kernel,
        out_shape=jax.ShapeDtypeStruct((M, N), out_dtype),
        grid=grid,
        in_specs=[
            pl.BlockSpec((tm, tk), lambda i, j, k: (i, k)),
            pl.BlockSpec((tk, tn), lambda i, j, k: (k, j)),
            pl.BlockSpec((1, tn), lambda i, j, k: (0, j)),
        ],
        out_specs=pl.BlockSpec((tm, tn), lambda i, j, k: (i, j)),
        scratch_shapes=[pltpu.VMEM((tm, tn), jnp.float32)],
        compiler_params=pltpu.CompilerParams(
            dimension_semantics=("parallel", "parallel", "arbitrary")),
    )(x, w, b)


def _mlp_tiled(x, params, compute_dtype, out_dtype):
    cd = compute_dtype
    h = _linear_relu_tiled(x.astype(cd), params["w_in"].astype(cd),
                           params["b_in"].astype(jnp.float32), cd)
    for (w, b) in params["hidden"]:
        h = _linear_relu_tiled(h, w.astype(cd), b.astype(jnp.float32), cd)
    return _linear_relu_tiled(h, params["w_out"].astype(cd),
                              params["b_out"].astype(jnp.float32), out_dtype)


# --------------------------------- wrapper -----------------------------------

def feedforward_nn_pallas(x, params, *, compute_dtype=jnp.float32,
                          max_tile_m=_MAX_TILE_M, force_tiled=False):
    """params: dict with w_in, b_in, hidden (list of (w, b)), w_out, b_out.

    compute_dtype: dtype fed to the MXU. Use jnp.bfloat16 on v6e/v7x for peak
    throughput and halved resident-weight VMEM (accumulation stays f32).
    """
    num_hidden = len(params["hidden"])
    batch, input_dim = x.shape
    hidden_dim = params["w_in"].shape[1]
    out_dim = params["w_out"].shape[1]
    out_dtype = x.dtype
    compute_dtype = jnp.dtype(compute_dtype)
    csz = compute_dtype.itemsize
    osz = jnp.dtype(out_dtype).itemsize

    # Cast only (no wrapper-side padding: blocks equal to the full feature dim
    # are legal and Mosaic pads ragged feature dims internally).
    xc = x.astype(compute_dtype)
    w_in = params["w_in"].astype(compute_dtype)
    b_in = params["b_in"].astype(jnp.float32)
    hidden = [(w.astype(compute_dtype), b.astype(jnp.float32))
              for (w, b) in params["hidden"]]
    w_out = params["w_out"].astype(compute_dtype)
    b_out = params["b_out"].astype(jnp.float32)

    args = [xc, w_in, b_in]
    for (w, b) in hidden:
        args += [w, b]
    args += [w_out, b_out]

    # ---- generation-aware VMEM budget, tile_m and fused/tiled strategy ----
    capacity = _vmem_capacity_bytes()
    budget = int(capacity * 0.85)        # headroom for Mosaic internal scratch

    def _vmem_tile_bytes(rows, cols, itemsize):
        sub = 8 * max(1, 4 // itemsize)  # sublane quantum for this dtype
        return _round_up(rows, sub) * _round_up(cols, _LANE) * itemsize

    # Resident (single-buffered) weights + biases at their padded VMEM footprint.
    weight_bytes = sum(_vmem_tile_bytes(a.shape[0], a.shape[1], a.dtype.itemsize)
                       for a in args[1:])

    in_p = _round_up(input_dim, _LANE)
    hid_p = _round_up(hidden_dim, _LANE)
    out_p = _round_up(out_dim, _LANE)
    # Per batch-row: double-buffered x / o tiles + ~2 live f32 (row, hid) temporaries.
    per_row = 2 * in_p * csz + 2 * out_p * osz + 2 * hid_p * 4

    row_multiple = 8 * max(1, 4 // csz)
    avail = budget - weight_bytes
    fused_fits = avail >= per_row * min(row_multiple, batch)

    if force_tiled or not fused_fits:
        return _mlp_tiled(x, params, compute_dtype, out_dtype)

    if batch <= row_multiple:
        tile_m = batch                              # single block == full batch
    else:
        tile_m = min(max_tile_m, avail // per_row, batch)
        tile_m = max(row_multiple, (tile_m // row_multiple) * row_multiple)
        if batch >= 2 * row_multiple:
            # keep >= 2 grid steps so both v7x TensorCores get work
            half = _round_up(_cdiv(batch, 2), row_multiple)
            tile_m = min(tile_m, half)
    grid_m = _cdiv(batch, tile_m)

    needed = weight_bytes + per_row * tile_m
    vmem_limit = max(32 << 20, min(int(needed * 1.25) + (4 << 20), budget))

    flops = 2 * batch * (input_dim * hidden_dim
                         + num_hidden * hidden_dim * hidden_dim
                         + hidden_dim * out_dim)
    bytes_accessed = (sum(int(a.size) * a.dtype.itemsize for a in args)
                      + batch * out_dim * osz)
    cost = pl.CostEstimate(flops=int(flops), transcendentals=0,
                           bytes_accessed=int(bytes_accessed))

    kernel = functools.partial(_mlp_kernel, num_hidden)

    def _run(single_buffer_weights):
        if single_buffer_weights:
            # Constant index_map -> nothing to prefetch; single-buffer to halve
            # resident-weight VMEM (key for v7x's 64 MiB/TC).
            def w_spec(shape):
                return pl.BlockSpec(shape, lambda i: (0, 0),
                                    pipeline_mode=pl.Buffered(1))
        else:
            def w_spec(shape):
                return pl.BlockSpec(shape, lambda i: (0, 0))

        in_specs = [pl.BlockSpec((tile_m, input_dim), lambda i: (i, 0))]
        in_specs += [w_spec(a.shape) for a in args[1:]]
        out_spec = pl.BlockSpec((tile_m, out_dim), lambda i: (i, 0))

        return pl.pallas_call(
            kernel,
            out_shape=jax.ShapeDtypeStruct((batch, out_dim), out_dtype),
            grid=(grid_m,),
            in_specs=in_specs,
            out_specs=out_spec,
            compiler_params=pltpu.CompilerParams(
                dimension_semantics=("parallel",),
                vmem_limit_bytes=vmem_limit),
            cost_estimate=cost,
        )(*args)

    try:
        return _run(single_buffer_weights=True)
    except Exception:
        pass
    try:
        return _run(single_buffer_weights=False)
    except Exception:
        pass
    # Last resort: per-layer tiled-weights path.
    return _mlp_tiled(x, params, compute_dtype, out_dtype)


# --------------------------- init / pure-JAX reference ------------------------

def init_params(key, input_dim, output_dim, hidden_dim, hidden_layers=1):
    """Deterministic init mimicking torch.nn.Linear (uniform(+-1/sqrt(fan_in)))."""
    def linear(k, fan_in, fan_out):
        kw, kb = jax.random.split(k)
        bound = 1.0 / jnp.sqrt(fan_in)
        w = jax.random.uniform(kw, (fan_in, fan_out), jnp.float32, -bound, bound)
        b = jax.random.uniform(kb, (1, fan_out), jnp.float32, -bound, bound)
        return w, b

    keys = jax.random.split(key, hidden_layers + 2)
    w_in, b_in = linear(keys[0], input_dim, hidden_dim)
    hidden = [linear(keys[1 + l], hidden_dim, hidden_dim) for l in range(hidden_layers)]
    w_out, b_out = linear(keys[-1], hidden_dim, output_dim)
    return {"w_in": w_in, "b_in": b_in, "hidden": hidden,
            "w_out": w_out, "b_out": b_out}


def feedforward_nn_ref(x, params):
    h = jnp.maximum(x @ params["w_in"] + params["b_in"], 0.0)
    for (w, b) in params["hidden"]:
        h = jnp.maximum(h @ w + b, 0.0)
    return jnp.maximum(h @ params["w_out"] + params["b_out"], 0.0)


if __name__ == "__main__":
    key = jax.random.PRNGKey(0)
    k_x, k_p = jax.random.split(key)

    batch, input_dim, hidden_dim, output_dim, hidden_layers = 8, 16, 32, 8, 1
    x = jax.random.normal(k_x, (batch, input_dim), jnp.float32)
    params = init_params(k_p, input_dim, output_dim, hidden_dim, hidden_layers)

    ref = feedforward_nn_ref(x, params)

    # Fused kernel, f32 compute (exact vs. reference at 1e-5).
    out = jax.block_until_ready(feedforward_nn_pallas(x, params))
    assert out.shape == (batch, output_dim)
    assert jnp.allclose(out, ref, atol=1e-5, rtol=1e-5), "fused f32 mismatch"

    # Tiled-weights fallback path (exercised explicitly at these small shapes).
    out_tiled = jax.block_until_ready(
        feedforward_nn_pallas(x, params, force_tiled=True))
    assert jnp.allclose(out_tiled, ref, atol=1e-5, rtol=1e-5), "tiled mismatch"

    # bf16 MXU path (the recommended config on v6e/v7x); loosened tolerance.
    out_bf16 = jax.block_until_ready(
        feedforward_nn_pallas(x, params, compute_dtype=jnp.bfloat16))
    assert jnp.allclose(out_bf16, ref, atol=5e-2, rtol=5e-2), "bf16 mismatch"

    print("KERNEL_OK")
</pallas_src>

<mosaic_0001>
module attributes {stable_mosaic.version = 11 : i64} {
  func.func @_mlp_kernel(%arg0: i32, %arg1: memref<8x16xf32, #tpu.memory_space<vmem>>, %arg2: memref<16x32xf32, #tpu.memory_space<vmem>>, %arg3: memref<1x32xf32, #tpu.memory_space<vmem>>, %arg4: memref<32x32xf32, #tpu.memory_space<vmem>>, %arg5: memref<1x32xf32, #tpu.memory_space<vmem>>, %arg6: memref<32x8xf32, #tpu.memory_space<vmem>>, %arg7: memref<1x8xf32, #tpu.memory_space<vmem>>, %arg8: memref<8x8xf32, #tpu.memory_space<vmem>>) attributes {dimension_semantics = [#tpu.dimension_semantics<parallel>], iteration_bounds = array<i64: 1>, scalar_prefetch = 0 : i64, scratch_operands = 0 : i64, tpu.core_type = #tpu.core_type<tc>, window_params = [{transform_indices = @transform_0, window_bounds = array<i64: 8, 16>}, {pipeline_mode = #tpu.pipeline_mode<synchronous>, transform_indices = @transform_1, window_bounds = array<i64: 16, 32>}, {pipeline_mode = #tpu.pipeline_mode<synchronous>, transform_indices = @transform_2, window_bounds = array<i64: 1, 32>}, {pipeline_mode = #tpu.pipeline_mode<synchronous>, transform_indices = @transform_3, window_bounds = array<i64: 32, 32>}, {pipeline_mode = #tpu.pipeline_mode<synchronous>, transform_indices = @transform_4, window_bounds = array<i64: 1, 32>}, {pipeline_mode = #tpu.pipeline_mode<synchronous>, transform_indices = @transform_5, window_bounds = array<i64: 32, 8>}, {pipeline_mode = #tpu.pipeline_mode<synchronous>, transform_indices = @transform_6, window_bounds = array<i64: 1, 8>}, {transform_indices = @transform_7, window_bounds = array<i64: 8, 8>}]} {
    %c0 = arith.constant 0 : index
    %c0_0 = arith.constant 0 : index
    %0 = vector.load %arg1[%c0, %c0_0] : memref<8x16xf32, #tpu.memory_space<vmem>>, vector<8x16xf32>
    %c0_1 = arith.constant 0 : index
    %c0_2 = arith.constant 0 : index
    %1 = vector.load %arg2[%c0_1, %c0_2] : memref<16x32xf32, #tpu.memory_space<vmem>>, vector<16x32xf32>
    %cst = arith.constant dense<0.000000e+00> : vector<8x32xf32>
    %2 = tpu.matmul %0, %1, %cst {dimension_numbers = #tpu.dot_dimension_numbers<[1], [0], [0], [1], [0, 0, 1, 1], [], []>} : vector<8x16xf32>, vector<16x32xf32>, vector<8x32xf32> -> vector<8x32xf32>
    %c0_3 = arith.constant 0 : index
    %c0_4 = arith.constant 0 : index
    %3 = vector.load %arg3[%c0_3, %c0_4] : memref<1x32xf32, #tpu.memory_space<vmem>>, vector<1x32xf32>
    %4 = vector.broadcast %3 : vector<1x32xf32> to vector<8x32xf32>
    %5 = arith.addf %2, %4 : vector<8x32xf32>
    %cst_5 = arith.constant 0.000000e+00 : f32
    %6 = vector.broadcast %cst_5 : f32 to vector<8x32xf32>
    %7 = arith.maximumf %5, %6 : vector<8x32xf32>
    %c0_6 = arith.constant 0 : index
    %c0_7 = arith.constant 0 : index
    %8 = vector.load %arg4[%c0_6, %c0_7] : memref<32x32xf32, #tpu.memory_space<vmem>>, vector<32x32xf32>
    %cst_8 = arith.constant dense<0.000000e+00> : vector<8x32xf32>
    %9 = tpu.matmul %7, %8, %cst_8 {dimension_numbers = #tpu.dot_dimension_numbers<[1], [0], [0], [1], [0, 0, 1, 1], [], []>} : vector<8x32xf32>, vector<32x32xf32>, vector<8x32xf32> -> vector<8x32xf32>
    %c0_9 = arith.constant 0 : index
    %c0_10 = arith.constant 0 : index
    %10 = vector.load %arg5[%c0_9, %c0_10] : memref<1x32xf32, #tpu.memory_space<vmem>>, vector<1x32xf32>
    %11 = vector.broadcast %10 : vector<1x32xf32> to vector<8x32xf32>
    %12 = arith.addf %9, %11 : vector<8x32xf32>
    %cst_11 = arith.constant 0.000000e+00 : f32
    %13 = vector.broadcast %cst_11 : f32 to vector<8x32xf32>
    %14 = arith.maximumf %12, %13 : vector<8x32xf32>
    %c0_12 = arith.constant 0 : index
    %c0_13 = arith.constant 0 : index
    %15 = vector.load %arg6[%c0_12, %c0_13] : memref<32x8xf32, #tpu.memory_space<vmem>>, vector<32x8xf32>
    %cst_14 = arith.constant dense<0.000000e+00> : vector<8x8xf32>
    %16 = tpu.matmul %14, %15, %cst_14 {dimension_numbers = #tpu.dot_dimension_numbers<[1], [0], [0], [1], [0, 0, 1, 1], [], []>} : vector<8x32xf32>, vector<32x8xf32>, vector<8x8xf32> -> vector<8x8xf32>
    %c0_15 = arith.constant 0 : index
    %c0_16 = arith.constant 0 : index
    %17 = vector.load %arg7[%c0_15, %c0_16] : memref<1x8xf32, #tpu.memory_space<vmem>>, vector<1x8xf32>
    %18 = vector.broadcast %17 : vector<1x8xf32> to vector<8x8xf32>
    %19 = arith.addf %16, %18 : vector<8x8xf32>
    %cst_17 = arith.constant 0.000000e+00 : f32
    %20 = vector.broadcast %cst_17 : f32 to vector<8x8xf32>
    %21 = arith.maximumf %19, %20 : vector<8x8xf32>
    %c0_18 = arith.constant 0 : index
    %c0_19 = arith.constant 0 : index
    %22 = vector.load %arg8[%c0_18, %c0_19] : memref<8x8xf32, #tpu.memory_space<vmem>>, vector<8x8xf32>
    tpu.vector_store %arg8[%c0_18, %c0_19], %21 {strides = array<i32>} : memref<8x8xf32, #tpu.memory_space<vmem>>, vector<8x8xf32>,
    return
  }
  func.func @transform_0(%arg0: i32) -> (i32, i32) {
    %c0_i32 = arith.constant 0 : i32
    %c0_i32_0 = arith.constant 0 : i32
    return %arg0, %c0_i32 : i32, i32
  }
  func.func @transform_1(%arg0: i32) -> (i32, i32) {
    %c0_i32 = arith.constant 0 : i32
    %c0_i32_0 = arith.constant 0 : i32
    %c0_i32_1 = arith.constant 0 : i32
    return %c0_i32, %c0_i32_0 : i32, i32
  }
  func.func @transform_2(%arg0: i32) -> (i32, i32) {
    %c0_i32 = arith.constant 0 : i32
    %c0_i32_0 = arith.constant 0 : i32
    %c0_i32_1 = arith.constant 0 : i32
    return %c0_i32, %c0_i32_0 : i32, i32
  }
  func.func @transform_3(%arg0: i32) -> (i32, i32) {
    %c0_i32 = arith.constant 0 : i32
    %c0_i32_0 = arith.constant 0 : i32
    %c0_i32_1 = arith.constant 0 : i32
    return %c0_i32, %c0_i32_0 : i32, i32
  }
  func.func @transform_4(%arg0: i32) -> (i32, i32) {
    %c0_i32 = arith.constant 0 : i32
    %c0_i32_0 = arith.constant 0 : i32
    %c0_i32_1 = arith.constant 0 : i32
    return %c0_i32, %c0_i32_0 : i32, i32
  }
  func.func @transform_5(%arg0: i32) -> (i32, i32) {
    %c0_i32 = arith.constant 0 : i32
    %c0_i32_0 = arith.constant 0 : i32
    %c0_i32_1 = arith.constant 0 : i32
    return %c0_i32, %c0_i32_0 : i32, i32
  }
  func.func @transform_6(%arg0: i32) -> (i32, i32) {
    %c0_i32 = arith.constant 0 : i32
    %c0_i32_0 = arith.constant 0 : i32
    %c0_i32_1 = arith.constant 0 : i32
    return %c0_i32, %c0_i32_0 : i32, i32
  }
  func.func @transform_7(%arg0: i32) -> (i32, i32) {
    %c0_i32 = arith.constant 0 : i32
    %c0_i32_0 = arith.constant 0 : i32
    return %arg0, %c0_i32 : i32, i32
  }
}

module attributes {stable_mosaic.version = 11 : i64} {
  func.func @_mlp_kernel(%arg0: i32, %arg1: memref<8x16xf32, #tpu.memory_space<vmem>>, %arg2: memref<16x32xf32, #tpu.memory_space<vmem>>, %arg3: memref<1x32xf32, #tpu.memory_space<vmem>>, %arg4: memref<32x32xf32, #tpu.memory_space<vmem>>, %arg5: memref<1x32xf32, #tpu.memory_space<vmem>>, %arg6: memref<32x8xf32, #tpu.memory_space<vmem>>, %arg7: memref<1x8xf32, #tpu.memory_space<vmem>>, %arg8: memref<8x8xf32, #tpu.memory_space<vmem>>) attributes {dimension_semantics = [#tpu.dimension_semantics<parallel>], iteration_bounds = array<i64: 1>, scalar_prefetch = 0 : i64, scratch_operands = 0 : i64, tpu.core_type = #tpu.core_type<tc>, window_params = [{transform_indices = @transform_0, window_bounds = array<i64: 8, 16>}, {pipeline_mode = #tpu.pipeline_mode<synchronous>, transform_indices = @transform_1, window_bounds = array<i64: 16, 32>}, {pipeline_mode = #tpu.pipeline_mode<synchronous>, transform_indices = @transform_2, window_bounds = array<i64: 1, 32>}, {pipeline_mode = #tpu.pipeline_mode<synchronous>, transform_indices = @transform_3, window_bounds = array<i64: 32, 32>}, {pipeline_mode = #tpu.pipeline_mode<synchronous>, transform_indices = @transform_4, window_bounds = array<i64: 1, 32>}, {pipeline_mode = #tpu.pipeline_mode<synchronous>, transform_indices = @transform_5, window_bounds = array<i64: 32, 8>}, {pipeline_mode = #tpu.pipeline_mode<synchronous>, transform_indices = @transform_6, window_bounds = array<i64: 1, 8>}, {transform_indices = @transform_7, window_bounds = array<i64: 8, 8>}]} {
    %c0 = arith.constant 0 : index
    %c0_0 = arith.constant 0 : index
    %0 = vector.load %arg1[%c0, %c0_0] : memref<8x16xf32, #tpu.memory_space<vmem>>, vector<8x16xf32>
    %c0_1 = arith.constant 0 : index
    %c0_2 = arith.constant 0 : index
    %1 = vector.load %arg2[%c0_1, %c0_2] : memref<16x32xf32, #tpu.memory_space<vmem>>, vector<16x32xf32>
    %cst = arith.constant dense<0.000000e+00> : vector<8x32xf32>
    %2 = tpu.matmul %0, %1, %cst {dimension_numbers = #tpu.dot_dimension_numbers<[1], [0], [0], [1], [0, 0, 1, 1], [], []>} : vector<8x16xf32>, vector<16x32xf32>, vector<8x32xf32> -> vector<8x32xf32>
    %c0_3 = arith.constant 0 : index
    %c0_4 = arith.constant 0 : index
    %3 = vector.load %arg3[%c0_3, %c0_4] : memref<1x32xf32, #tpu.memory_space<vmem>>, vector<1x32xf32>
    %4 = vector.broadcast %3 : vector<1x32xf32> to vector<8x32xf32>
    %5 = arith.addf %2, %4 : vector<8x32xf32>
    %cst_5 = arith.constant 0.000000e+00 : f32
    %6 = vector.broadcast %cst_5 : f32 to vector<8x32xf32>
    %7 = arith.maximumf %5, %6 : vector<8x32xf32>
    %c0_6 = arith.constant 0 : index
    %c0_7 = arith.constant 0 : index
    %8 = vector.load %arg4[%c0_6, %c0_7] : memref<32x32xf32, #tpu.memory_space<vmem>>, vector<32x32xf32>
    %cst_8 = arith.constant dense<0.000000e+00> : vector<8x32xf32>
    %9 = tpu.matmul %7, %8, %cst_8 {dimension_numbers = #tpu.dot_dimension_numbers<[1], [0], [0], [1], [0, 0, 1, 1], [], []>} : vector<8x32xf32>, vector<32x32xf32>, vector<8x32xf32> -> vector<8x32xf32>
    %c0_9 = arith.constant 0 : index
    %c0_10 = arith.constant 0 : index
    %10 = vector.load %arg5[%c0_9, %c0_10] : memref<1x32xf32, #tpu.memory_space<vmem>>, vector<1x32xf32>
    %11 = vector.broadcast %10 : vector<1x32xf32> to vector<8x32xf32>
    %12 = arith.addf %9, %11 : vector<8x32xf32>
    %cst_11 = arith.constant 0.000000e+00 : f32
    %13 = vector.broadcast %cst_11 : f32 to vector<8x32xf32>
    %14 = arith.maximumf %12, %13 : vector<8x32xf32>
    %c0_12 = arith.constant 0 : index
    %c0_13 = arith.constant 0 : index
    %15 = vector.load %arg6[%c0_12, %c0_13] : memref<32x8xf32, #tpu.memory_space<vmem>>, vector<32x8xf32>
    %cst_14 = arith.constant dense<0.000000e+00> : vector<8x8xf32>
    %16 = tpu.matmul %14, %15, %cst_14 {dimension_numbers = #tpu.dot_dimension_numbers<[1], [0], [0], [1], [0, 0, 1, 1], [], []>} : vector<8x32xf32>, vector<32x8xf32>, vector<8x8xf32> -> vector<8x8xf32>
    %c0_15 = arith.constant 0 : index
    %c0_16 = arith.constant 0 : index
    %17 = vector.load %arg7[%c0_15, %c0_16] : memref<1x8xf32, #tpu.memory_space<vmem>>, vector<1x8xf32>
    %18 = vector.broadcast %17 : vector<1x8xf32> to vector<8x8xf32>
    %19 = arith.addf %16, %18 : vector<8x8xf32>
    %cst_17 = arith.constant 0.000000e+00 : f32
    %20 = vector.broadcast %cst_17 : f32 to vector<8x8xf32>
    %21 = arith.maximumf %19, %20 : vector<8x8xf32>
    %c0_18 = arith.constant 0 : index
    %c0_19 = arith.constant 0 : index
    %22 = vector.load %arg8[%c0_18, %c0_19] : memref<8x8xf32, #tpu.memory_space<vmem>>, vector<8x8xf32>
    tpu.vector_store %arg8[%c0_18, %c0_19], %21 {strides = array<i32>} : memref<8x8xf32, #tpu.memory_space<vmem>>, vector<8x8xf32>,
    return
  }
  func.func @transform_0(%arg0: i32) -> (i32, i32) {
    %c0_i32 = arith.constant 0 : i32
    %c0_i32_0 = arith.constant 0 : i32
    return %arg0, %c0_i32 : i32, i32
  }
  func.func @transform_1(%arg0: i32) -> (i32, i32) {
    %c0_i32 = arith.constant 0 : i32
    %c0_i32_0 = arith.constant 0 : i32
    %c0_i32_1 = arith.constant 0 : i32
    return %c0_i32, %c0_i32_0 : i32, i32
  }
  func.func @transform_2(%arg0: i32) -> (i32, i32) {
    %c0_i32 = arith.constant 0 : i32
    %c0_i32_0 = arith.constant 0 : i32
    %c0_i32_1 = arith.constant 0 : i32
    return %c0_i32, %c0_i32_0 : i32, i32
  }
  func.func @transform_3(%arg0: i32) -> (i32, i32) {
    %c0_i32 = arith.constant 0 : i32
    %c0_i32_0 = arith.constant 0 : i32
    %c0_i32_1 = arith.constant 0 : i32
    return %c0_i32, %c0_i32_0 : i32, i32
  }
  func.func @transform_4(%arg0: i32) -> (i32, i32) {
    %c0_i32 = arith.constant 0 : i32
    %c0_i32_0 = arith.constant 0 : i32
    %c0_i32_1 = arith.constant 0 : i32
    return %c0_i32, %c0_i32_0 : i32, i32
  }
  func.func @transform_5(%arg0: i32) -> (i32, i32) {
    %c0_i32 = arith.constant 0 : i32
    %c0_i32_0 = arith.constant 0 : i32
    %c0_i32_1 = arith.constant 0 : i32
    return %c0_i32, %c0_i32_0 : i32, i32
  }
  func.func @transform_6(%arg0: i32) -> (i32, i32) {
    %c0_i32 = arith.constant 0 : i32
    %c0_i32_0 = arith.constant 0 : i32
    %c0_i32_1 = arith.constant 0 : i32
    return %c0_i32, %c0_i32_0 : i32, i32
  }
  func.func @transform_7(%arg0: i32) -> (i32, i32) {
    %c0_i32 = arith.constant 0 : i32
    %c0_i32_0 = arith.constant 0 : i32
    return %arg0, %c0_i32 : i32, i32
  }
}

module attributes {stable_mosaic.version = 11 : i64} {
  func.func @_linear_relu_kernel(%arg0: i32, %arg1: i32, %arg2: i32, %arg3: memref<8x16xf32, #tpu.memory_space<vmem>>, %arg4: memref<16x32xf32, #tpu.memory_space<vmem>>, %arg5: memref<1x32xf32, #tpu.memory_space<vmem>>, %arg6: memref<8x32xf32, #tpu.memory_space<vmem>>, %arg7: memref<8x32xf32, #tpu.memory_space<vmem>>) attributes {dimension_semantics = [#tpu.dimension_semantics<parallel>, #tpu.dimension_semantics<parallel>, #tpu.dimension_semantics<arbitrary>], iteration_bounds = array<i64: 1, 1, 1>, scalar_prefetch = 0 : i64, scratch_operands = 1 : i64, tpu.core_type = #tpu.core_type<tc>, window_params = [{transform_indices = @transform_0, window_bounds = array<i64: 8, 16>}, {transform_indices = @transform_1, window_bounds = array<i64: 16, 32>}, {transform_indices = @transform_2, window_bounds = array<i64: 1, 32>}, {transform_indices = @transform_3, window_bounds = array<i64: 8, 32>}]} {
    %c0_i32 = arith.constant 0 : i32
    %0 = arith.cmpi eq, %arg2, %c0_i32 : i32
    %1 = arith.extui %0 : i1 to i32
    %c0_i32_0 = arith.constant 0 : i32
    %2 = arith.cmpi ne, %1, %c0_i32_0 : i32
    scf.if %2 {
      %cst_10 = arith.constant 0.000000e+00 : f32
      %12 = vector.broadcast %cst_10 : f32 to vector<8x32xf32>
      %c0_11 = arith.constant 0 : index
      %c0_12 = arith.constant 0 : index
      %13 = vector.load %arg7[%c0_11, %c0_12] : memref<8x32xf32, #tpu.memory_space<vmem>>, vector<8x32xf32>
      tpu.vector_store %arg7[%c0_11, %c0_12], %12 {strides = array<i32>} : memref<8x32xf32, #tpu.memory_space<vmem>>, vector<8x32xf32>,
    } else {
    }
    %c0 = arith.constant 0 : index
    %c0_1 = arith.constant 0 : index
    %3 = vector.load %arg7[%c0, %c0_1] : memref<8x32xf32, #tpu.memory_space<vmem>>, vector<8x32xf32>
    %c0_2 = arith.constant 0 : index
    %c0_3 = arith.constant 0 : index
    %4 = vector.load %arg3[%c0_2, %c0_3] : memref<8x16xf32, #tpu.memory_space<vmem>>, vector<8x16xf32>
    %c0_4 = arith.constant 0 : index
    %c0_5 = arith.constant 0 : index
    %5 = vector.load %arg4[%c0_4, %c0_5] : memref<16x32xf32, #tpu.memory_space<vmem>>, vector<16x32xf32>
    %cst = arith.constant dense<0.000000e+00> : vector<8x32xf32>
    %6 = tpu.matmul %4, %5, %cst {dimension_numbers = #tpu.dot_dimension_numbers<[1], [0], [0], [1], [0, 0, 1, 1], [], []>} : vector<8x16xf32>, vector<16x32xf32>, vector<8x32xf32> -> vector<8x32xf32>
    %7 = arith.addf %3, %6 : vector<8x32xf32>
    %c0_6 = arith.constant 0 : index
    %c0_7 = arith.constant 0 : index
    %8 = vector.load %arg7[%c0_6, %c0_7] : memref<8x32xf32, #tpu.memory_space<vmem>>, vector<8x32xf32>
    tpu.vector_store %arg7[%c0_6, %c0_7], %7 {strides = array<i32>} : memref<8x32xf32, #tpu.memory_space<vmem>>, vector<8x32xf32>,
    %c0_i32_8 = arith.constant 0 : i32
    %9 = arith.cmpi eq, %arg2, %c0_i32_8 : i32
    %10 = arith.extui %9 : i1 to i32
    %c0_i32_9 = arith.constant 0 : i32
    %11 = arith.cmpi ne, %10, %c0_i32_9 : i32
    scf.if %11 {
      %c0_10 = arith.constant 0 : index
      %c0_11 = arith.constant 0 : index
      %12 = vector.load %arg7[%c0_10, %c0_11] : memref<8x32xf32, #tpu.memory_space<vmem>>, vector<8x32xf32>
      %c0_12 = arith.constant 0 : index
      %c0_13 = arith.constant 0 : index
      %13 = vector.load %arg5[%c0_12, %c0_13] : memref<1x32xf32, #tpu.memory_space<vmem>>, vector<1x32xf32>
      %14 = vector.broadcast %13 : vector<1x32xf32> to vector<8x32xf32>
      %15 = arith.addf %12, %14 : vector<8x32xf32>
      %cst_14 = arith.constant 0.000000e+00 : f32
      %16 = vector.broadcast %cst_14 : f32 to vector<8x32xf32>
      %17 = arith.maximumf %15, %16 : vector<8x32xf32>
      %c0_15 = arith.constant 0 : index
      %c0_16 = arith.constant 0 : index
      %18 = vector.load %arg6[%c0_15, %c0_16] : memref<8x32xf32, #tpu.memory_space<vmem>>, vector<8x32xf32>
      tpu.vector_store %arg6[%c0_15, %c0_16], %17 {strides = array<i32>} : memref<8x32xf32, #tpu.memory_space<vmem>>, vector<8x32xf32>,
    } else {
    }
    return
  }
  func.func @transform_0(%arg0: i32, %arg1: i32, %arg2: i32) -> (i32, i32) {
    %c0_i32 = arith.constant 0 : i32
    return %arg0, %arg2 : i32, i32
  }
  func.func @transform_1(%arg0: i32, %arg1: i32, %arg2: i32) -> (i32, i32) {
    %c0_i32 = arith.constant 0 : i32
    return %arg2, %arg1 : i32, i32
  }
  func.func @transform_2(%arg0: i32, %arg1: i32, %arg2: i32) -> (i32, i32) {
    %c0_i32 = arith.constant 0 : i32
    %c0_i32_0 = arith.constant 0 : i32
    return %c0_i32, %arg1 : i32, i32
  }
  func.func @transform_3(%arg0: i32, %arg1: i32, %arg2: i32) -> (i32, i32) {
    %c0_i32 = arith.constant 0 : i32
    return %arg0, %arg1 : i32, i32
  }
}

</mosaic_0001>

<llo_original>
// kernel: tpu_custom_call.1
$region0: #{tpu_custom_call.1}
  #allocation0 [shape = 'u32[]', space=smem, size = 0x4, offset = 0x4, fixed_abs, tag = 'smem constant byte address 0x4 - core index']
  #allocation1 [shape = 'u32[72,128]{1,0:T(1,128)}', space=vmem, size = 0x9000, scoped, tag = 'internal scratch']
  %s0 = inlined_call_operand.vmem [shape: f32[8,16], index: 0, kind: input, shape index: {}]
  %s1 = inlined_call_operand.hbm [shape: f32[16,32], index: 1, kind: input, shape index: {}]
  %s2 = inlined_call_operand.vmem [shape: f32[1,32], index: 2, kind: input, shape index: {}]
  %s3 = inlined_call_operand.vmem [shape: f32[32,32], index: 3, kind: input, shape index: {}]
  %s4 = inlined_call_operand.vmem [shape: f32[1,32], index: 4, kind: input, shape index: {}]
  %s5 = inlined_call_operand.vmem [shape: f32[32,8], index: 5, kind: input, shape index: {}]
  %s6 = inlined_call_operand.vmem [shape: f32[1,8], index: 6, kind: input, shape index: {}]
  %s7 = inlined_call_operand.hbm [shape: f32[8,8], index: 7, kind: output, shape index: {}]
  %s8 = sld [smem:[#allocation0]]
  $region42: #{tpu_custom_call.1} parent=0
    _
  %s10 = ssub.s32 1, %s8
  %s11 = scalar_select 0, %s10, %s8
  $region1: #{tpu_custom_call.1} parent=0
    #allocation2 [shape = 'u8[8192]{0}', space=vmem, size = 0x2000, scoped, tag = 'input window, operand 1, single buffered']
    #allocation3 [shape = 's32[1]{0}', space=sflag, size = 0x4, scoped, tag = 'scoped memory for tpu_custom_call.1']
    #allocation4 [shape = 's32[1]{0}', space=sflag, size = 0x4, scoped, tag = 'scoped memory for tpu_custom_call.1']
    #allocation5 [shape = 'u8[4096]{0}', space=vmem, size = 0x1000, scoped, tag = 'output window, operand 0, single buffered']
    %12 = vsyncpa [#allocation3], 0
    %13 = vsyncpa [#allocation4], 0
    // Predicated region
    $region2: #{tpu_custom_call.1} parent=1 // pred_check
      _
    $region3: #{tpu_custom_call.1} parent=1 // pred_check_branch
      %15 = sbr.rel (0) target = $region5
    $region4: #{tpu_custom_call.1} parent=1 // pred_region
      _
    $region5: #{tpu_custom_call.1} parent=1 // pred_fallthru
      _
    // Predicated region
    $region6: #{tpu_custom_call.1} parent=1 // pred_check
      _
    $region7: #{tpu_custom_call.1} parent=1 // pred_check_branch
      %17 = sbr.rel (0) target = $region9
    $region8: #{tpu_custom_call.1} parent=1 // pred_region
      %19 = vsyncadd [#allocation3], 0
      %s20 = sshll.u32 %s1, 4
      %s21 = int_to_ptr.hbm [resolvable:$true] %s20
      %s22 = sshll.u32 [#allocation2], 4
      %s23 = int_to_ptr.vmem [resolvable:$true] %s22
      %28 = dma.hbm_to_vmem [thread:$0]  %s21, 256, %s23, [#allocation3], 128, 128, 8
    $region9: #{tpu_custom_call.1} parent=1 // pred_fallthru
      _
    // Predicated region
    $region10: #{tpu_custom_call.1} parent=1 // pred_check
      _
    $region11: #{tpu_custom_call.1} parent=1 // pred_check_branch
      %30 = sbr.rel (0) target = $region13
    $region12: #{tpu_custom_call.1} parent=1 // pred_region
      _
    $region13: #{tpu_custom_call.1} parent=1 // pred_fallthru
      _
    // Predicated region
    $region14: #{tpu_custom_call.1} parent=1 // pred_check
      _
    $region15: #{tpu_custom_call.1} parent=1 // pred_check_branch
      %32 = sbr.rel (0) target = $region17
    $region16: #{tpu_custom_call.1} parent=1 // pred_region
      _
    $region17: #{tpu_custom_call.1} parent=1 // pred_fallthru
      _
    // Predicated region
    $region18: #{tpu_custom_call.1} parent=1 // pred_check
      _
    $region19: #{tpu_custom_call.1} parent=1 // pred_check_branch
      %34 = sbr.rel (0) target = $region21
    $region20: #{tpu_custom_call.1} parent=1 // pred_region
      _
    $region21: #{tpu_custom_call.1} parent=1 // pred_fallthru
      _
    // Predicated region
    $region22: #{tpu_custom_call.1} parent=1 // pred_check
      _
    $region23: #{tpu_custom_call.1} parent=1 // pred_check_branch
      %36 = sbr.rel (0) target = $region25
    $region24: #{tpu_custom_call.1} parent=1 // pred_region
      _
    $region25: #{tpu_custom_call.1} parent=1 // pred_fallthru
      _
    // Predicated region
    $region26: #{tpu_custom_call.1} parent=1 // pred_check
      _
    $region27: #{tpu_custom_call.1} parent=1 // pred_check_branch
      %38 = sbr.rel (0) target = $region29
    $region28: #{tpu_custom_call.1} parent=1 // pred_region
      _
    $region29: #{tpu_custom_call.1} parent=1 // pred_fallthru
      _
    // Predicated region
    $region30: #{tpu_custom_call.1} parent=1 // pred_check
      _
    $region31: #{tpu_custom_call.1} parent=1 // pred_check_branch
      %40 = sbr.rel (0) target = $region33
    $region32: #{tpu_custom_call.1} parent=1 // pred_region
      %42 = dma.done [#allocation3], 256
    $region33: #{tpu_custom_call.1} parent=1 // pred_fallthru
      _
    %v43 = vld [vmem:[%s0] sm:$0xff]
    %v44 = vld [vmem:[#allocation2] sm:$0xff]
    %v45 = vld [vmem:[#allocation2 + $0x8] sm:$0xff]
    %v46 = vld [vmem:[%s2] sm:$0x1]
    %v48 = vperm.slane %v46, 0
    %vm50 = vcmask 130048
    %v52 = vsel %vm50, %v43, 0
    %54 = vmatpush.msra.mxu0 0.0
    %55 = vmatpush.msra.mxu0 0.0
    %56 = vmatpush.msra.mxu0 0.0
    %57 = vmatpush.msra.mxu0 0.0
    %58 = vmatpush.msra.mxu0 0.0
    %59 = vmatpush.msra.mxu0 0.0
    %60 = vmatpush.msra.mxu0 0.0
    %61 = vmatpush.msra.mxu0 0.0
    %62 = vmatpush.msra.mxu0 0.0
    %63 = vmatpush.msra.mxu0 0.0
    %64 = vmatpush.msra.mxu0 0.0
    %65 = vmatpush.msra.mxu0 0.0
    %66 = vmatpush.msra.mxu0 0.0
    %67 = vmatpush.msra.mxu0 0.0
    %68 = vmatpush.msra.mxu0 %v45
    %69 = vmatpush.msra.mxu0 %v44
    %70 = vmatmul.f32.gmra.mxu0 %v52
    %v71 = vpop.f32.mrf.mxu0
    %v72 = vadd.f32 %v48, %v71
    %73 = vdwg.mxu0
    %v74 = vmax.f32 %v72, 0.0
    %v75 = vld [vmem:[%s3] sm:$0xff]
    %v76 = vld [vmem:[%s3 + $0x8] sm:$0xff]
    %v77 = vld [vmem:[%s3 + $0x10] sm:$0xff]
    %v78 = vld [vmem:[%s3 + $0x18] sm:$0xff]
    %v79 = vld [vmem:[%s4] sm:$0x1]
    %v81 = vperm.slane %v79, 0
    %vm83 = vcmask 261120
    %v85 = vsel %vm83, %v74, 0
    %87 = vmatpush.msra.mxu0 0.0
    %88 = vmatpush.msra.mxu0 0.0
    %89 = vmatpush.msra.mxu0 0.0
    %90 = vmatpush.msra.mxu0 0.0
    %91 = vmatpush.msra.mxu0 0.0
    %92 = vmatpush.msra.mxu0 0.0
    %93 = vmatpush.msra.mxu0 0.0
    %94 = vmatpush.msra.mxu0 0.0
    %95 = vmatpush.msra.mxu0 0.0
    %96 = vmatpush.msra.mxu0 0.0
    %97 = vmatpush.msra.mxu0 0.0
    %98 = vmatpush.msra.mxu0 0.0
    %99 = vmatpush.msra.mxu0 %v78
    %100 = vmatpush.msra.mxu0 %v77
    %101 = vmatpush.msra.mxu0 %v76
    %102 = vmatpush.msra.mxu0 %v75
    %103 = vmatmul.f32.gmra.mxu0 %v85
    %v104 = vpop.f32.mrf.mxu0
    %v105 = vadd.f32 %v81, %v104
    %106 = vdwg.mxu0
    %v107 = vmax.f32 %v105, 0.0
    %v108 = vld [vmem:[%s5] sm:$0xff]
    %v109 = vld [vmem:[%s5 + $0x8] sm:$0xff]
    %v110 = vld [vmem:[%s5 + $0x10] sm:$0xff]
    %v111 = vld [vmem:[%s5 + $0x18] sm:$0xff]
    %v112 = vld [vmem:[%s6] sm:$0x1]
    %v114 = vperm.slane %v112, 0
    %v117 = vsel %vm83, %v107, 0
    %119 = vmatpush.msra.mxu0 0.0
    %120 = vmatpush.msra.mxu0 0.0
    %121 = vmatpush.msra.mxu0 0.0
    %122 = vmatpush.msra.mxu0 0.0
    %123 = vmatpush.msra.mxu0 0.0
    %124 = vmatpush.msra.mxu0 0.0
    %125 = vmatpush.msra.mxu0 0.0
    %126 = vmatpush.msra.mxu0 0.0
    %127 = vmatpush.msra.mxu0 0.0
    %128 = vmatpush.msra.mxu0 0.0
    %129 = vmatpush.msra.mxu0 0.0
    %130 = vmatpush.msra.mxu0 0.0
    %131 = vmatpush.msra.mxu0 %v111
    %132 = vmatpush.msra.mxu0 %v110
    %133 = vmatpush.msra.mxu0 %v109
    %134 = vmatpush.msra.mxu0 %v108
    %135 = vmatmul.f32.gmra.mxu0 %v117
    %v136 = vpop.f32.mrf.mxu0
    %v137 = vadd.f32 %v114, %v136
    %138 = vdwg.mxu0
    %v139 = vmax.f32 %v137, 0.0
    %vm140 = vcmask 64512
    %141 = vst.msk [vmem:[#allocation5] sm:$0xff] %vm140, %v139
    // Predicated region
    $region34: #{tpu_custom_call.1} parent=1 // pred_check
      _
    $region35: #{tpu_custom_call.1} parent=1 // pred_check_branch
      %143 = sbr.rel (0) target = $region37
    $region36: #{tpu_custom_call.1} parent=1 // pred_region
      %145 = vsyncadd [#allocation4], 0
      %s147 = sshll.u32 [#allocation5], 4
      %s148 = int_to_ptr.vmem [resolvable:$true] %s147
      %s149 = sshll.u32 %s7, 4
      %s150 = int_to_ptr.hbm [resolvable:$true] %s149
      %152 = dma.vmem_to_hbm [thread:$0]  %s148, 128, %s150, [#allocation4]
    $region37: #{tpu_custom_call.1} parent=1 // pred_fallthru
      _
    // Predicated region
    $region38: #{tpu_custom_call.1} parent=1 // pred_check
      _
    $region39: #{tpu_custom_call.1} parent=1 // pred_check_branch
      %154 = sbr.rel (0) target = $region41
    $region40: #{tpu_custom_call.1} parent=1 // pred_region
      %156 = dma.done [#allocation4], 128
    $region41: #{tpu_custom_call.1} parent=1 // pred_fallthru
      _
    %157 = vsyncpa [#allocation3], 1
    %158 = vsyncpa [#allocation4], 1

// kernel: tpu_custom_call.1
$region0: #{tpu_custom_call.1}
  #allocation0 [shape = 'u32[]', space=smem, size = 0x4, offset = 0x4, fixed_abs, tag = 'smem constant byte address 0x4 - core index']
  #allocation1 [shape = 'u32[72,128]{1,0:T(1,128)}', space=vmem, size = 0x9000, scoped, tag = 'internal scratch']
  %s0 = inlined_call_operand.vmem [shape: f32[8,16], index: 0, kind: input, shape index: {}]
  %s1 = inlined_call_operand.hbm [shape: f32[16,32], index: 1, kind: input, shape index: {}]
  %s2 = inlined_call_operand.vmem [shape: f32[1,32], index: 2, kind: input, shape index: {}]
  %s3 = inlined_call_operand.vmem [shape: f32[32,32], index: 3, kind: input, shape index: {}]
  %s4 = inlined_call_operand.vmem [shape: f32[1,32], index: 4, kind: input, shape index: {}]
  %s5 = inlined_call_operand.vmem [shape: f32[32,8], index: 5, kind: input, shape index: {}]
  %s6 = inlined_call_operand.vmem [shape: f32[1,8], index: 6, kind: input, shape index: {}]
  %s7 = inlined_call_operand.hbm [shape: f32[8,8], index: 7, kind: output, shape index: {}]
  %s8 = sld [smem:[#allocation0]]
  $region42: #{tpu_custom_call.1} parent=0
    _
  %s10 = ssub.s32 1, %s8
  %s11 = scalar_select 0, %s10, %s8
  $region1: #{tpu_custom_call.1} parent=0
    #allocation2 [shape = 'u8[8192]{0}', space=vmem, size = 0x2000, scoped, tag = 'input window, operand 1, single buffered']
    #allocation3 [shape = 's32[1]{0}', space=sflag, size = 0x4, scoped, tag = 'scoped memory for tpu_custom_call.1']
    #allocation4 [shape = 's32[1]{0}', space=sflag, size = 0x4, scoped, tag = 'scoped memory for tpu_custom_call.1']
    #allocation5 [shape = 'u8[4096]{0}', space=vmem, size = 0x1000, scoped, tag = 'output window, operand 0, single buffered']
    %12 = vsyncpa [#allocation3], 0
    %13 = vsyncpa [#allocation4], 0
    // Predicated region
    $region2: #{tpu_custom_call.1} parent=1 // pred_check
      _
    $region3: #{tpu_custom_call.1} parent=1 // pred_check_branch
      %15 = sbr.rel (0) target = $region5
    $region4: #{tpu_custom_call.1} parent=1 // pred_region
      _
    $region5: #{tpu_custom_call.1} parent=1 // pred_fallthru
      _
    // Predicated region
    $region6: #{tpu_custom_call.1} parent=1 // pred_check
      _
    $region7: #{tpu_custom_call.1} parent=1 // pred_check_branch
      %17 = sbr.rel (0) target = $region9
    $region8: #{tpu_custom_call.1} parent=1 // pred_region
      %19 = vsyncadd [#allocation3], 0
      %s20 = sshll.u32 %s1, 4
      %s21 = int_to_ptr.hbm [resolvable:$true] %s20
      %s22 = sshll.u32 [#allocation2], 4
      %s23 = int_to_ptr.vmem [resolvable:$true] %s22
      %28 = dma.hbm_to_vmem [thread:$0]  %s21, 256, %s23, [#allocation3], 128, 128, 8
    $region9: #{tpu_custom_call.1} parent=1 // pred_fallthru
      _
    // Predicated region
    $region10: #{tpu_custom_call.1} parent=1 // pred_check
      _
    $region11: #{tpu_custom_call.1} parent=1 // pred_check_branch
      %30 = sbr.rel (0) target = $region13
    $region12: #{tpu_custom_call.1} parent=1 // pred_region
      _
    $region13: #{tpu_custom_call.1} parent=1 // pred_fallthru
      _
    // Predicated region
    $region14: #{tpu_custom_call.1} parent=1 // pred_check
      _
    $region15: #{tpu_custom_call.1} parent=1 // pred_check_branch
      %32 = sbr.rel (0) target = $region17
    $region16: #{tpu_custom_call.1} parent=1 // pred_region
      _
    $region17: #{tpu_custom_call.1} parent=1 // pred_fallthru
      _
    // Predicated region
    $region18: #{tpu_custom_call.1} parent=1 // pred_check
      _
    $region19: #{tpu_custom_call.1} parent=1 // pred_check_branch
      %34 = sbr.rel (0) target = $region21
    $region20: #{tpu_custom_call.1} parent=1 // pred_region
      _
    $region21: #{tpu_custom_call.1} parent=1 // pred_fallthru
      _
    // Predicated region
    $region22: #{tpu_custom_call.1} parent=1 // pred_check
      _
    $region23: #{tpu_custom_call.1} parent=1 // pred_check_branch
      %36 = sbr.rel (0) target = $region25
    $region24: #{tpu_custom_call.1} parent=1 // pred_region
      _
    $region25: #{tpu_custom_call.1} parent=1 // pred_fallthru
      _
    // Predicated region
    $region26: #{tpu_custom_call.1} parent=1 // pred_check
      _
    $region27: #{tpu_custom_call.1} parent=1 // pred_check_branch
      %38 = sbr.rel (0) target = $region29
    $region28: #{tpu_custom_call.1} parent=1 // pred_region
      _
    $region29: #{tpu_custom_call.1} parent=1 // pred_fallthru
      _
    // Predicated region
    $region30: #{tpu_custom_call.1} parent=1 // pred_check
      _
    $region31: #{tpu_custom_call.1} parent=1 // pred_check_branch
      %40 = sbr.rel (0) target = $region33
    $region32: #{tpu_custom_call.1} parent=1 // pred_region
      %42 = dma.done [#allocation3], 256
    $region33: #{tpu_custom_call.1} parent=1 // pred_fallthru
      _
    %v43 = vld [vmem:[%s0] sm:$0xff]
    %v44 = vld [vmem:[#allocation2] sm:$0xff]
    %v45 = vld [vmem:[#allocation2 + $0x8] sm:$0xff]
    %v46 = vld [vmem:[%s2] sm:$0x1]
    %v48 = vperm.slane %v46, 0
    %vm50 = vcmask 130048
    %v52 = vsel %vm50, %v43, 0
    %54 = vmatpush.msra.mxu0 0.0
    %55 = vmatpush.msra.mxu0 0.0
    %56 = vmatpush.msra.mxu0 0.0
    %57 = vmatpush.msra.mxu0 0.0
    %58 = vmatpush.msra.mxu0 0.0
    %59 = vmatpush.msra.mxu0 0.0
    %60 = vmatpush.msra.mxu0 0.0
    %61 = vmatpush.msra.mxu0 0.0
    %62 = vmatpush.msra.mxu0 0.0
    %63 = vmatpush.msra.mxu0 0.0
    %64 = vmatpush.msra.mxu0 0.0
    %65 = vmatpush.msra.mxu0 0.0
    %66 = vmatpush.msra.mxu0 0.0
    %67 = vmatpush.msra.mxu0 0.0
    %68 = vmatpush.msra.mxu0 %v45
    %69 = vmatpush.msra.mxu0 %v44
    %70 = vmatmul.f32.gmra.mxu0 %v52
    %v71 = vpop.f32.mrf.mxu0
    %v72 = vadd.f32 %v48, %v71
    %73 = vdwg.mxu0
    %v74 = vmax.f32 %v72, 0.0
    %v75 = vld [vmem:[%s3] sm:$0xff]
    %v76 = vld [vmem:[%s3 + $0x8] sm:$0xff]
    %v77 = vld [vmem:[%s3 + $0x10] sm:$0xff]
    %v78 = vld [vmem:[%s3 + $0x18] sm:$0xff]
    %v79 = vld [vmem:[%s4] sm:$0x1]
    %v81 = vperm.slane %v79, 0
    %vm83 = vcmask 261120
    %v85 = vsel %vm83, %v74, 0
    %87 = vmatpush.msra.mxu0 0.0
    %88 = vmatpush.msra.mxu0 0.0
    %89 = vmatpush.msra.mxu0 0.0
    %90 = vmatpush.msra.mxu0 0.0
    %91 = vmatpush.msra.mxu0 0.0
    %92 = vmatpush.msra.mxu0 0.0
    %93 = vmatpush.msra.mxu0 0.0
    %94 = vmatpush.msra.mxu0 0.0
    %95 = vmatpush.msra.mxu0 0.0
    %96 = vmatpush.msra.mxu0 0.0
    %97 = vmatpush.msra.mxu0 0.0
    %98 = vmatpush.msra.mxu0 0.0
    %99 = vmatpush.msra.mxu0 %v78
    %100 = vmatpush.msra.mxu0 %v77
    %101 = vmatpush.msra.mxu0 %v76
    %102 = vmatpush.msra.mxu0 %v75
    %103 = vmatmul.f32.gmra.mxu0 %v85
    %v104 = vpop.f32.mrf.mxu0
    %v105 = vadd.f32 %v81, %v104
    %106 = vdwg.mxu0
    %v107 = vmax.f32 %v105, 0.0
    %v108 = vld [vmem:[%s5] sm:$0xff]
    %v109 = vld [vmem:[%s5 + $0x8] sm:$0xff]
    %v110 = vld [vmem:[%s5 + $0x10] sm:$0xff]
    %v111 = vld [vmem:[%s5 + $0x18] sm:$0xff]
    %v112 = vld [vmem:[%s6] sm:$0x1]
    %v114 = vperm.slane %v112, 0
    %v117 = vsel %vm83, %v107, 0
    %119 = vmatpush.msra.mxu0 0.0
    %120 = vmatpush.msra.mxu0 0.0
    %121 = vmatpush.msra.mxu0 0.0
    %122 = vmatpush.msra.mxu0 0.0
    %123 = vmatpush.msra.mxu0 0.0
    %124 = vmatpush.msra.mxu0 0.0
    %125 = vmatpush.msra.mxu0 0.0
    %126 = vmatpush.msra.mxu0 0.0
    %127 = vmatpush.msra.mxu0 0.0
    %128 = vmatpush.msra.mxu0 0.0
    %129 = vmatpush.msra.mxu0 0.0
    %130 = vmatpush.msra.mxu0 0.0
    %131 = vmatpush.msra.mxu0 %v111
    %132 = vmatpush.msra.mxu0 %v110
    %133 = vmatpush.msra.mxu0 %v109
    %134 = vmatpush.msra.mxu0 %v108
    %135 = vmatmul.f32.gmra.mxu0 %v117
    %v136 = vpop.f32.mrf.mxu0
    %v137 = vadd.f32 %v114, %v136
    %138 = vdwg.mxu0
    %v139 = vmax.f32 %v137, 0.0
    %vm140 = vcmask 64512
    %141 = vst.msk [vmem:[#allocation5] sm:$0xff] %vm140, %v139
    // Predicated region
    $region34: #{tpu_custom_call.1} parent=1 // pred_check
      _
    $region35: #{tpu_custom_call.1} parent=1 // pred_check_branch
      %143 = sbr.rel (0) target = $region37
    $region36: #{tpu_custom_call.1} parent=1 // pred_region
      %145 = vsyncadd [#allocation4], 0
      %s147 = sshll.u32 [#allocation5], 4
      %s148 = int_to_ptr.vmem [resolvable:$true] %s147
      %s149 = sshll.u32 %s7, 4
      %s150 = int_to_ptr.hbm [resolvable:$true] %s149
      %152 = dma.vmem_to_hbm [thread:$0]  %s148, 128, %s150, [#allocation4]
    $region37: #{tpu_custom_call.1} parent=1 // pred_fallthru
      _
    // Predicated region
    $region38: #{tpu_custom_call.1} parent=1 // pred_check
      _
    $region39: #{tpu_custom_call.1} parent=1 // pred_check_branch
      %154 = sbr.rel (0) target = $region41
    $region40: #{tpu_custom_call.1} parent=1 // pred_region
      %156 = dma.done [#allocation4], 128
    $region41: #{tpu_custom_call.1} parent=1 // pred_fallthru
      _
    %157 = vsyncpa [#allocation3], 1
    %158 = vsyncpa [#allocation4], 1

// kernel: tpu_custom_call.1
$region0: #{tpu_custom_call.1}
  #allocation0 [shape = 'u32[]', space=smem, size = 0x4, offset = 0x4, fixed_abs, tag = 'smem constant byte address 0x4 - core index']
  #allocation1 [shape = 'u32[72,128]{1,0:T(1,128)}', space=vmem, size = 0x9000, scoped, tag = 'internal scratch']
  #allocation2 [shape = 'f32[8,32]{1,0:T(8,128)}', space=vmem, size = 0x1000, scoped, tag = 'scratch operand']
  %s0 = inlined_call_operand.hbm [shape: f32[8,16], index: 0, kind: input, shape index: {}]
  %s1 = inlined_call_operand.hbm [shape: f32[16,32], index: 1, kind: input, shape index: {}]
  %s2 = inlined_call_operand.vmem [shape: f32[1,32], index: 2, kind: input, shape index: {}]
  %s3 = inlined_call_operand.hbm [shape: f32[8,32], index: 3, kind: output, shape index: {}]
  %s4 = sld [smem:[#allocation0]]
  $region38: #{tpu_custom_call.1} parent=0
    _
  %s6 = ssub.s32 1, %s4
  %s7 = scalar_select 0, %s6, %s4
  $region1: #{tpu_custom_call.1} parent=0
    #allocation3 [shape = 'u8[4096]{0}', space=vmem, size = 0x1000, scoped, tag = 'input window, operand 0, single buffered']
    #allocation4 [shape = 's32[1]{0}', space=sflag, size = 0x4, scoped, tag = 'scoped memory for tpu_custom_call.1']
    #allocation5 [shape = 's32[1]{0}', space=sflag, size = 0x4, scoped, tag = 'scoped memory for tpu_custom_call.1']
    #allocation6 [shape = 'u8[8192]{0}', space=vmem, size = 0x2000, scoped, tag = 'input window, operand 1, single buffered']
    #allocation7 [shape = 's32[1]{0}', space=sflag, size = 0x4, scoped, tag = 'scoped memory for tpu_custom_call.1']
    #allocation8 [shape = 'u8[4096]{0}', space=vmem, size = 0x1000, scoped, tag = 'output window, operand 0, single buffered']
    %8 = vsyncpa [#allocation4], 0
    %9 = vsyncpa [#allocation7], 0
    %10 = vsyncpa [#allocation5], 0
    // Predicated region
    $region2: #{tpu_custom_call.1} parent=1 // pred_check
      _
    $region3: #{tpu_custom_call.1} parent=1 // pred_check_branch
      %12 = sbr.rel (0) target = $region5
    $region4: #{tpu_custom_call.1} parent=1 // pred_region
      %14 = vsyncadd [#allocation4], 0
      %s16 = sshll.u32 %s0, 4
      %s17 = int_to_ptr.hbm [resolvable:$true] %s16
      %s18 = sshll.u32 [#allocation3], 4
      %s19 = int_to_ptr.vmem [resolvable:$true] %s18
      %21 = dma.hbm_to_vmem [thread:$0]  %s17, 128, %s19, [#allocation4]
    $region5: #{tpu_custom_call.1} parent=1 // pred_fallthru
      _
    // Predicated region
    $region6: #{tpu_custom_call.1} parent=1 // pred_check
      _
    $region7: #{tpu_custom_call.1} parent=1 // pred_check_branch
      %23 = sbr.rel (0) target = $region9
    $region8: #{tpu_custom_call.1} parent=1 // pred_region
      %25 = vsyncadd [#allocation7], 0
      %s26 = sshll.u32 %s1, 4
      %s27 = int_to_ptr.hbm [resolvable:$true] %s26
      %s28 = sshll.u32 [#allocation6], 4
      %s29 = int_to_ptr.vmem [resolvable:$true] %s28
      %34 = dma.hbm_to_vmem [thread:$0]  %s27, 256, %s29, [#allocation7], 128, 128, 8
    $region9: #{tpu_custom_call.1} parent=1 // pred_fallthru
      _
    // Predicated region
    $region10: #{tpu_custom_call.1} parent=1 // pred_check
      _
    $region11: #{tpu_custom_call.1} parent=1 // pred_check_branch
      %36 = sbr.rel (0) target = $region13
    $region12: #{tpu_custom_call.1} parent=1 // pred_region
      _
    $region13: #{tpu_custom_call.1} parent=1 // pred_fallthru
      _
    // Predicated region
    $region14: #{tpu_custom_call.1} parent=1 // pred_check
      _
    $region15: #{tpu_custom_call.1} parent=1 // pred_check_branch
      %38 = sbr.rel (0) target = $region17
    $region16: #{tpu_custom_call.1} parent=1 // pred_region
      %40 = dma.done [#allocation4], 128
    $region17: #{tpu_custom_call.1} parent=1 // pred_fallthru
      _
    // Predicated region
    $region18: #{tpu_custom_call.1} parent=1 // pred_check
      _
    $region19: #{tpu_custom_call.1} parent=1 // pred_check_branch
      %42 = sbr.rel (0) target = $region21
    $region20: #{tpu_custom_call.1} parent=1 // pred_region
      %44 = dma.done [#allocation7], 256
    $region21: #{tpu_custom_call.1} parent=1 // pred_fallthru
      _
    %p45 = scmp.eq.s32.totalorder 0, 0
    // Predicated region
    $region22: #{tpu_custom_call.1} parent=1 // pred_check
      %p46 = pneg %p45
    $region23: #{tpu_custom_call.1} parent=1 // pred_check_branch
      %48 = sbr.rel (%p46) target = $region25
    $region24: #{tpu_custom_call.1} parent=1 // pred_region
      %vm49 = vcmask 261120
      %50 = vst.msk [vmem:[#allocation2] sm:$0xff] %vm49, 0.0
    $region25: #{tpu_custom_call.1} parent=1 // pred_fallthru
      _
    %v51 = vld [vmem:[#allocation2] sm:$0xff]
    %v52 = vld [vmem:[#allocation3] sm:$0xff]
    %v53 = vld [vmem:[#allocation6] sm:$0xff]
    %v54 = vld [vmem:[#allocation6 + $0x8] sm:$0xff]
    %vm55 = vcmask 130048
    %v57 = vsel %vm55, %v52, 0
    %59 = vmatpush.msra.mxu0 0.0
    %60 = vmatpush.msra.mxu0 0.0
    %61 = vmatpush.msra.mxu0 0.0
    %62 = vmatpush.msra.mxu0 0.0
    %63 = vmatpush.msra.mxu0 0.0
    %64 = vmatpush.msra.mxu0 0.0
    %65 = vmatpush.msra.mxu0 0.0
    %66 = vmatpush.msra.mxu0 0.0
    %67 = vmatpush.msra.mxu0 0.0
    %68 = vmatpush.msra.mxu0 0.0
    %69 = vmatpush.msra.mxu0 0.0
    %70 = vmatpush.msra.mxu0 0.0
    %71 = vmatpush.msra.mxu0 0.0
    %72 = vmatpush.msra.mxu0 0.0
    %73 = vmatpush.msra.mxu0 %v54
    %74 = vmatpush.msra.mxu0 %v53
    %75 = vmatmul.f32.gmra.mxu0 %v57
    %v76 = vpop.f32.mrf.mxu0
    %v77 = vadd.f32 0.0, %v76
    %78 = vdwg.mxu0
    %v79 = vadd.f32 %v51, %v77
    %vm80 = vcmask 261120
    %81 = vst.msk [vmem:[#allocation2] sm:$0xff] %vm80, %v79
    // Predicated region
    $region26: #{tpu_custom_call.1} parent=1 // pred_check
      %p82 = pneg %p45
    $region27: #{tpu_custom_call.1} parent=1 // pred_check_branch
      %84 = sbr.rel (%p82) target = $region29
    $region28: #{tpu_custom_call.1} parent=1 // pred_region
      %v85 = vld [vmem:[#allocation2] sm:$0xff]
      %v86 = vld [vmem:[%s2] sm:$0x1]
      %v88 = vperm.slane %v86, 0
      %v90 = vadd.f32 %v85, %v88
      %v91 = vmax.f32 %v90, 0.0
      %92 = vst.msk [vmem:[#allocation8] sm:$0xff] %vm80, %v91
    $region29: #{tpu_custom_call.1} parent=1 // pred_fallthru
      _
    // Predicated region
    $region30: #{tpu_custom_call.1} parent=1 // pred_check
      _
    $region31: #{tpu_custom_call.1} parent=1 // pred_check_branch
      %94 = sbr.rel (0) target = $region33
    $region32: #{tpu_custom_call.1} parent=1 // pred_region
      %96 = vsyncadd [#allocation5], 0
      %s98 = sshll.u32 [#allocation8], 4
      %s99 = int_to_ptr.vmem [resolvable:$true] %s98
      %s100 = sshll.u32 %s3, 4
      %s101 = int_to_ptr.hbm [resolvable:$true] %s100
      %103 = dma.vmem_to_hbm [thread:$0]  %s99, 128, %s101, [#allocation5]
    $region33: #{tpu_custom_call.1} parent=1 // pred_fallthru
      _
    // Predicated region
    $region34: #{tpu_custom_call.1} parent=1 // pred_check
      _
    $region35: #{tpu_custom_call.1} parent=1 // pred_check_branch
      %105 = sbr.rel (0) target = $region37
    $region36: #{tpu_custom_call.1} parent=1 // pred_region
      %107 = dma.done [#allocation5], 128
    $region37: #{tpu_custom_call.1} parent=1 // pred_fallthru
      _
    %108 = vsyncpa [#allocation4], 1
    %109 = vsyncpa [#allocation7], 1
    %110 = vsyncpa [#allocation5], 1

</llo_original>
